<compile_context>
chip_gen: v5e
topology: v5e:2x2
jax: 0.10.0
libtpu: 0.0.40
codegen_flags: <defaults>
</compile_context>

<pallas_src>
import functools

import jax
import jax.numpy as jnp
from jax.experimental import pallas as pl
from jax.experimental.pallas import tpu as pltpu


# ------------------------------ Pallas kernel -------------------------------


def _stage_shifted_rows(xcat_ref, rows, n_images, rows_per_image):
    """Stage [up | center | down] shifted row views into a K-concat scratch.

    xcat_ref : (N*H, 3*WC) VMEM scratch
    rows     : (N*H, WC) value (image n occupies rows n*H .. n*H+H-1)

    After this, xcat[r, kh*WC:(kh+1)*WC] holds the SAME-padded row (h+kh-1) of
    image n for r = n*H + h (zeros at the per-image top/bottom halos), so a
    single matmul against the (3*WC, W*Cout) block-banded weights computes the
    full 3x3 conv of all rows of all images.
    """
    H = rows_per_image
    WC = rows.shape[-1]
    rows = rows.astype(xcat_ref.dtype)
    zero_row = jnp.zeros((1, WC), xcat_ref.dtype)

    # Center K-block (kh=1): all rows, no halo.
    xcat_ref[:, WC:2 * WC] = rows

    for n in range(n_images):
        r0 = n * H
        # kh=0 block: padded row (h-1) of image n  -> zero halo at h=0.
        xcat_ref[r0:r0 + 1, 0:WC] = zero_row
        xcat_ref[r0 + 1:r0 + H, 0:WC] = rows[r0:r0 + H - 1]
        # kh=2 block: padded row (h+1) of image n  -> zero halo at h=H-1.
        xcat_ref[r0:r0 + H - 1, 2 * WC:3 * WC] = rows[r0 + 1:r0 + H]
        xcat_ref[r0 + H - 1:r0 + H, 2 * WC:3 * WC] = zero_row


def _fused_extractor_kernel(x_ref, g1_ref, b1_ref, g2_ref, b2_ref,
                            c1_ref, c2_ref, r2_ref,
                            xcat1_ref, xcat2_ref,
                            *, n_images, rows_per_image):
    """conv1 -> relu1 -> conv2 -> relu2 for the whole (folded) batch in VMEM.

    x_ref   : (N*H, W*Cin)           lane-dense activations, batch folded in M
    g*_ref  : (3*W*Cin_l, W*Cout_l)  K-concatenated block-banded weights
    b*_ref  : (1, W*Cout_l)          bias tiled across w
    c1_ref  : (N*H, W*C1)            conv1 output (pre-ReLU, selected)
    c2_ref  : (N*H, W*C2)            conv2 output (pre-ReLU, selected)
    r2_ref  : (N*H, W*C2)            relu2 output (final)
    xcat*_ref: VMEM (N*H, 3*W*C)     K-concatenated shifted-row scratch
    """
    f32 = jnp.float32

    # ---- conv1 (selected output is the PRE-ReLU conv result) ----
    _stage_shifted_rows(xcat1_ref, x_ref[...], n_images, rows_per_image)
    y1 = jnp.dot(xcat1_ref[...], g1_ref[...], preferred_element_type=f32)
    y1 = y1 + b1_ref[...]
    c1_ref[...] = y1.astype(c1_ref.dtype)

    # ---- relu1 -> conv2 (selected, pre-ReLU) -> relu2 (final) ----
    _stage_shifted_rows(xcat2_ref, jnp.maximum(y1, 0.0),
                        n_images, rows_per_image)
    y2 = jnp.dot(xcat2_ref[...], g2_ref[...], preferred_element_type=f32)
    y2 = y2 + b2_ref[...]
    c2_ref[...] = y2.astype(c2_ref.dtype)
    r2_ref[...] = jnp.maximum(y2, 0.0).astype(r2_ref.dtype)


# ----------------------------- Pallas wrapper --------------------------------


def _fused_extractor(x_rows, g1, b1t, g2, b2t, *, n_images, rows_per_image,
                     compute_dtype):
    """x_rows: (N*H, W*Cin) lane-dense activations -> (c1, c2, relu2)."""
    NH, WCin = x_rows.shape
    WC1 = g1.shape[-1]
    WC2 = g2.shape[-1]

    kernel = functools.partial(_fused_extractor_kernel,
                               n_images=n_images,
                               rows_per_image=rows_per_image)

    out_shape = (
        jax.ShapeDtypeStruct((NH, WC1), jnp.float32),   # conv1 (selected)
        jax.ShapeDtypeStruct((NH, WC2), jnp.float32),   # conv2 (selected)
        jax.ShapeDtypeStruct((NH, WC2), jnp.float32),   # relu2 (final)
    )
    return pl.pallas_call(
        kernel,
        out_shape=out_shape,
        grid=(1,),   # single step: whole batch folded into the matmul M dim
        in_specs=[
            pl.BlockSpec((NH, WCin), lambda i: (0, 0)),
            pl.BlockSpec(g1.shape, lambda i: (0, 0)),
            pl.BlockSpec(b1t.shape, lambda i: (0, 0)),
            pl.BlockSpec(g2.shape, lambda i: (0, 0)),
            pl.BlockSpec(b2t.shape, lambda i: (0, 0)),
        ],
        out_specs=[
            pl.BlockSpec((NH, WC1), lambda i: (0, 0)),
            pl.BlockSpec((NH, WC2), lambda i: (0, 0)),
            pl.BlockSpec((NH, WC2), lambda i: (0, 0)),
        ],
        scratch_shapes=[
            pltpu.VMEM((NH, 3 * WCin), compute_dtype),  # conv1 K-concat LHS
            pltpu.VMEM((NH, 3 * WC1), compute_dtype),   # conv2 K-concat LHS
        ],
        compiler_params=pltpu.CompilerParams(
            dimension_semantics=("arbitrary",),
            vmem_limit_bytes=32 * 1024 * 1024,
        ),
    )(x_rows, g1, b1t, g2, b2t)


@functools.partial(jax.jit, static_argnames=("compute_dtype",))
def _selective_forward(x_nhwc, g1, b1t, g2, b2t, compute_dtype=jnp.float32):
    """NHWC in, (NHWC final, (NHWC conv1, NHWC conv2)) out — one jit.

    The only non-Pallas ops are trailing-dim reshapes (no transposes).
    """
    N, H, W, Cin = x_nhwc.shape
    C1 = g1.shape[-1] // W
    C2 = g2.shape[-1] // W

    x_rows = x_nhwc.reshape(N * H, W * Cin)          # pure dim-merge reshape
    c1_o, c2_o, r2_o = _fused_extractor(
        x_rows, g1, b1t, g2, b2t,
        n_images=N, rows_per_image=H, compute_dtype=compute_dtype)

    unpack = lambda t, c: t.reshape(N, H, W, c)      # pure dim-split reshape
    return unpack(r2_o, C2), (unpack(c1_o, C1), unpack(c2_o, C2))


# ----------------------- weight packing for the kernel -----------------------


def build_row_gemm_weights(w, W, dtype=jnp.float32):
    """Fold the kh/kw shifts + channel mix of a 3x3 conv into one GEMM RHS.

    w: (3, 3, Cin, Cout) HWIO  ->  G: (3*W*Cin, W*Cout) with
      G[kh*W*Cin + w'*Cin + ci, w*Cout + co] = w[kh, kw, ci, co]
                                               iff  w' == w + kw - 1,
    so  lhs_row @ G  (lhs_row = [padded_row(h), padded_row(h+1),
    padded_row(h+2)]) is the SAME-padded 3x3 conv of row h.  Out-of-range w'
    has no entry -> implicit zero padding along W.
    """
    gs = []
    for kh in range(3):
        g = None
        for kw in range(3):
            e = jnp.eye(W, W, k=1 - kw, dtype=jnp.float32)  # e[w+kw-1, w] = 1
            term = jnp.kron(e, w[kh, kw].astype(jnp.float32))
            g = term if g is None else g + term
        gs.append(g)
    return jnp.concatenate(gs, axis=0).astype(dtype)   # (3*W*Cin, W*Cout)


def tile_bias(b, W):
    """b: (Cout,) -> (1, W*Cout) with b_tiled[0, w*Cout+co] = b[co]."""
    return jnp.tile(b.astype(jnp.float32), W).reshape(1, -1)


# --------------------------- SelectiveSequential -----------------------------


class SelectiveSequentialPallas:
    """Fused JAX/Pallas equivalent of the PyTorch SelectiveSequential instance
    conv1 -> relu1 -> conv2 -> relu2 with to_select = ('conv1', 'conv2').

    Interface is NHWC / lane-dense end-to-end: input (N, H, W, Cin), returns
    (final_output (N,H,W,C2), [conv1_output (N,H,W,C1), conv2_output
    (N,H,W,C2)]).  Callers that truly need NCHW can transpose outside.
    """
    # TODO(synk): the generic module-dict container (arbitrary modules /
    # arbitrary to_select) has no single-kernel equivalent; this class fuses
    # the concrete extractor stack and hard-codes which intermediates it emits.

    def __init__(self, to_select, params, compute_dtype=jnp.float32):
        assert tuple(to_select) == ("conv1", "conv2")
        self._to_select = tuple(to_select)
        self._w1, self._b1, self._w2, self._b2 = params
        # bf16 operands (compute_dtype=jnp.bfloat16) cut vmatmul passes ~3x and
        # halve weight VMEM; default f32 keeps exact parity at this tiny size.
        self._compute_dtype = compute_dtype
        self._packed = {}   # cache of kernel-layout weights keyed by image W

    def _packed_params(self, W):
        if W not in self._packed:
            dt = self._compute_dtype
            self._packed[W] = (
                build_row_gemm_weights(self._w1, W, dt), tile_bias(self._b1, W),
                build_row_gemm_weights(self._w2, W, dt), tile_bias(self._b2, W),
            )
        return self._packed[W]

    def __call__(self, x_nhwc):
        W = x_nhwc.shape[2]
        g1, b1t, g2, b2t = self._packed_params(W)
        out, selected = _selective_forward(
            x_nhwc, g1, b1t, g2, b2t, compute_dtype=self._compute_dtype)
        return out, list(selected)


# --------------------------------- setup ------------------------------------


def make_conv_params(key, cin, cout):
    """Deterministic PyTorch-style Conv2d init (uniform +-1/sqrt(fan_in))."""
    kw_key, kb_key = jax.random.split(key)
    fan_in = cin * 3 * 3
    bound = 1.0 / jnp.sqrt(jnp.float32(fan_in))
    # PyTorch weight layout (Cout, Cin, 3, 3) -> HWIO (3, 3, Cin, Cout)
    w_oihw = jax.random.uniform(
        kw_key, (cout, cin, 3, 3), jnp.float32, -bound, bound)
    w = jnp.transpose(w_oihw, (2, 3, 1, 0))
    b = jax.random.uniform(kb_key, (cout,), jnp.float32, -bound, bound)
    return w, b


def reference_forward(x_nhwc, params):
    """Pure-JAX NHWC reference (lax.conv) for a sanity check."""
    w1, b1, w2, b2 = params

    def conv(x, w, b):
        y = jax.lax.conv_general_dilated(
            x, w, window_strides=(1, 1), padding="SAME",
            dimension_numbers=("NHWC", "HWIO", "NHWC"))
        return y + b[None, None, None, :]

    c1 = conv(x_nhwc, w1, b1)
    r1 = jnp.maximum(c1, 0.0)
    c2 = conv(r1, w2, b2)
    r2 = jnp.maximum(c2, 0.0)
    return r2, [c1, c2]


# ---------------------------------- main -------------------------------------

if __name__ == "__main__":
    key = jax.random.PRNGKey(0)
    k_model, k_x = jax.random.split(key)
    k1, k2 = jax.random.split(k_model)

    w1, b1 = make_conv_params(k1, 4, 8)
    w2, b2 = make_conv_params(k2, 8, 8)
    params = (w1, b1, w2, b2)

    model = SelectiveSequentialPallas(("conv1", "conv2"), params)

    # NHWC (lane-dense) input: batch=2, spatial=16x16, channels=4.
    x = jax.random.normal(k_x, (2, 16, 16, 4), jnp.float32)

    output, selected = model(x)
    output = jax.block_until_ready(output)
    selected = [jax.block_until_ready(s) for s in selected]

    # Sanity check against a pure-JAX reference.
    ref_out, ref_sel = reference_forward(x, params)
    assert output.shape == (2, 16, 16, 8)
    assert len(selected) == 2
    assert jnp.allclose(output, ref_out, atol=1e-4, rtol=1e-4)
    for got, want in zip(selected, ref_sel):
        assert got.shape == want.shape
        assert jnp.allclose(got, want, atol=1e-4, rtol=1e-4)

    print("KERNEL_OK")
</pallas_src>

<mosaic_0001>
module attributes {stable_mosaic.version = 11 : i64} {
  func.func @_fused_extractor_kernel(%arg0: i32, %arg1: memref<32x64xf32, #tpu.memory_space<vmem>>, %arg2: memref<192x128xf32, #tpu.memory_space<vmem>>, %arg3: memref<1x128xf32, #tpu.memory_space<vmem>>, %arg4: memref<384x128xf32, #tpu.memory_space<vmem>>, %arg5: memref<1x128xf32, #tpu.memory_space<vmem>>, %arg6: memref<32x128xf32, #tpu.memory_space<vmem>>, %arg7: memref<32x128xf32, #tpu.memory_space<vmem>>, %arg8: memref<32x128xf32, #tpu.memory_space<vmem>>, %arg9: memref<32x192xf32, #tpu.memory_space<vmem>>, %arg10: memref<32x384xf32, #tpu.memory_space<vmem>>) attributes {dimension_semantics = [#tpu.dimension_semantics<arbitrary>], iteration_bounds = array<i64: 1>, scalar_prefetch = 0 : i64, scratch_operands = 2 : i64, tpu.core_type = #tpu.core_type<tc>, window_params = [{pipeline_mode = #tpu.pipeline_mode<synchronous>, transform_indices = @transform_0, window_bounds = array<i64: 32, 64>}, {pipeline_mode = #tpu.pipeline_mode<synchronous>, transform_indices = @transform_1, window_bounds = array<i64: 192, 128>}, {pipeline_mode = #tpu.pipeline_mode<synchronous>, transform_indices = @transform_2, window_bounds = array<i64: 1, 128>}, {pipeline_mode = #tpu.pipeline_mode<synchronous>, transform_indices = @transform_3, window_bounds = array<i64: 384, 128>}, {pipeline_mode = #tpu.pipeline_mode<synchronous>, transform_indices = @transform_4, window_bounds = array<i64: 1, 128>}, {pipeline_mode = #tpu.pipeline_mode<synchronous>, transform_indices = @transform_5, window_bounds = array<i64: 32, 128>}, {pipeline_mode = #tpu.pipeline_mode<synchronous>, transform_indices = @transform_6, window_bounds = array<i64: 32, 128>}, {pipeline_mode = #tpu.pipeline_mode<synchronous>, transform_indices = @transform_7, window_bounds = array<i64: 32, 128>}]} {
    %c0 = arith.constant 0 : index
    %c0_0 = arith.constant 0 : index
    %0 = vector.load %arg1[%c0, %c0_0] : memref<32x64xf32, #tpu.memory_space<vmem>>, vector<32x64xf32>
    %cst = arith.constant 0.000000e+00 : f32
    %1 = vector.broadcast %cst : f32 to vector<1x64xf32>
    %c0_1 = arith.constant 0 : index
    %c64 = arith.constant 64 : index
    %2 = vector.load %arg9[%c0_1, %c64] : memref<32x192xf32, #tpu.memory_space<vmem>>, vector<32x64xf32>
    tpu.vector_store %arg9[%c0_1, %c64], %0 {strides = array<i32>} : memref<32x192xf32, #tpu.memory_space<vmem>>, vector<32x64xf32>,
    %c0_2 = arith.constant 0 : index
    %c0_3 = arith.constant 0 : index
    %3 = vector.load %arg9[%c0_2, %c0_3] : memref<32x192xf32, #tpu.memory_space<vmem>>, vector<1x64xf32>
    tpu.vector_store %arg9[%c0_2, %c0_3], %1 {strides = array<i32>} : memref<32x192xf32, #tpu.memory_space<vmem>>, vector<1x64xf32>,
    %4 = vector.extract_strided_slice %0 {offsets = [0, 0], sizes = [15, 64], strides = [1, 1]} : vector<32x64xf32> to vector<15x64xf32>
    %c1 = arith.constant 1 : index
    %c0_4 = arith.constant 0 : index
    %5 = vector.load %arg9[%c1, %c0_4] : memref<32x192xf32, #tpu.memory_space<vmem>>, vector<15x64xf32>
    tpu.vector_store %arg9[%c1, %c0_4], %4 {strides = array<i32>} : memref<32x192xf32, #tpu.memory_space<vmem>>, vector<15x64xf32>,
    %6 = vector.extract_strided_slice %0 {offsets = [1, 0], sizes = [15, 64], strides = [1, 1]} : vector<32x64xf32> to vector<15x64xf32>
    %c0_5 = arith.constant 0 : index
    %c128 = arith.constant 128 : index
    %7 = vector.load %arg9[%c0_5, %c128] : memref<32x192xf32, #tpu.memory_space<vmem>>, vector<15x64xf32>
    tpu.vector_store %arg9[%c0_5, %c128], %6 {strides = array<i32>} : memref<32x192xf32, #tpu.memory_space<vmem>>, vector<15x64xf32>,
    %c15 = arith.constant 15 : index
    %c128_6 = arith.constant 128 : index
    %8 = vector.load %arg9[%c15, %c128_6] : memref<32x192xf32, #tpu.memory_space<vmem>>, vector<1x64xf32>
    tpu.vector_store %arg9[%c15, %c128_6], %1 {strides = array<i32>} : memref<32x192xf32, #tpu.memory_space<vmem>>, vector<1x64xf32>,
    %c16 = arith.constant 16 : index
    %c0_7 = arith.constant 0 : index
    %9 = vector.load %arg9[%c16, %c0_7] : memref<32x192xf32, #tpu.memory_space<vmem>>, vector<1x64xf32>
    tpu.vector_store %arg9[%c16, %c0_7], %1 {strides = array<i32>} : memref<32x192xf32, #tpu.memory_space<vmem>>, vector<1x64xf32>,
    %10 = vector.extract_strided_slice %0 {offsets = [16, 0], sizes = [15, 64], strides = [1, 1]} : vector<32x64xf32> to vector<15x64xf32>
    %c17 = arith.constant 17 : index
    %c0_8 = arith.constant 0 : index
    %11 = vector.load %arg9[%c17, %c0_8] : memref<32x192xf32, #tpu.memory_space<vmem>>, vector<15x64xf32>
    tpu.vector_store %arg9[%c17, %c0_8], %10 {strides = array<i32>} : memref<32x192xf32, #tpu.memory_space<vmem>>, vector<15x64xf32>,
    %12 = vector.extract_strided_slice %0 {offsets = [17, 0], sizes = [15, 64], strides = [1, 1]} : vector<32x64xf32> to vector<15x64xf32>
    %c16_9 = arith.constant 16 : index
    %c128_10 = arith.constant 128 : index
    %13 = vector.load %arg9[%c16_9, %c128_10] : memref<32x192xf32, #tpu.memory_space<vmem>>, vector<15x64xf32>
    tpu.vector_store %arg9[%c16_9, %c128_10], %12 {strides = array<i32>} : memref<32x192xf32, #tpu.memory_space<vmem>>, vector<15x64xf32>,
    %c31 = arith.constant 31 : index
    %c128_11 = arith.constant 128 : index
    %14 = vector.load %arg9[%c31, %c128_11] : memref<32x192xf32, #tpu.memory_space<vmem>>, vector<1x64xf32>
    tpu.vector_store %arg9[%c31, %c128_11], %1 {strides = array<i32>} : memref<32x192xf32, #tpu.memory_space<vmem>>, vector<1x64xf32>,
    %c0_12 = arith.constant 0 : index
    %c0_13 = arith.constant 0 : index
    %15 = vector.load %arg9[%c0_12, %c0_13] : memref<32x192xf32, #tpu.memory_space<vmem>>, vector<32x192xf32>
    %c0_14 = arith.constant 0 : index
    %c0_15 = arith.constant 0 : index
    %16 = vector.load %arg2[%c0_14, %c0_15] : memref<192x128xf32, #tpu.memory_space<vmem>>, vector<192x128xf32>
    %cst_16 = arith.constant dense<0.000000e+00> : vector<32x128xf32>
    %17 = tpu.matmul %15, %16, %cst_16 {dimension_numbers = #tpu.dot_dimension_numbers<[1], [0], [0], [1], [0, 0, 1, 1], [], []>} : vector<32x192xf32>, vector<192x128xf32>, vector<32x128xf32> -> vector<32x128xf32>
    %c0_17 = arith.constant 0 : index
    %c0_18 = arith.constant 0 : index
    %18 = vector.load %arg3[%c0_17, %c0_18] : memref<1x128xf32, #tpu.memory_space<vmem>>, vector<1x128xf32>
    %19 = vector.broadcast %18 : vector<1x128xf32> to vector<32x128xf32>
    %20 = arith.addf %17, %19 : vector<32x128xf32>
    %c0_19 = arith.constant 0 : index
    %c0_20 = arith.constant 0 : index
    %21 = vector.load %arg6[%c0_19, %c0_20] : memref<32x128xf32, #tpu.memory_space<vmem>>, vector<32x128xf32>
    tpu.vector_store %arg6[%c0_19, %c0_20], %20 {strides = array<i32>} : memref<32x128xf32, #tpu.memory_space<vmem>>, vector<32x128xf32>,
    %cst_21 = arith.constant 0.000000e+00 : f32
    %22 = vector.broadcast %cst_21 : f32 to vector<32x128xf32>
    %23 = arith.maximumf %20, %22 : vector<32x128xf32>
    %cst_22 = arith.constant 0.000000e+00 : f32
    %24 = vector.broadcast %cst_22 : f32 to vector<1x128xf32>
    %c0_23 = arith.constant 0 : index
    %c128_24 = arith.constant 128 : index
    %25 = vector.load %arg10[%c0_23, %c128_24] : memref<32x384xf32, #tpu.memory_space<vmem>>, vector<32x128xf32>
    tpu.vector_store %arg10[%c0_23, %c128_24], %23 {strides = array<i32>} : memref<32x384xf32, #tpu.memory_space<vmem>>, vector<32x128xf32>,
    %c0_25 = arith.constant 0 : index
    %c0_26 = arith.constant 0 : index
    %26 = vector.load %arg10[%c0_25, %c0_26] : memref<32x384xf32, #tpu.memory_space<vmem>>, vector<1x128xf32>
    tpu.vector_store %arg10[%c0_25, %c0_26], %24 {strides = array<i32>} : memref<32x384xf32, #tpu.memory_space<vmem>>, vector<1x128xf32>,
    %27 = vector.extract_strided_slice %23 {offsets = [0, 0], sizes = [15, 128], strides = [1, 1]} : vector<32x128xf32> to vector<15x128xf32>
    %c1_27 = arith.constant 1 : index
    %c0_28 = arith.constant 0 : index
    %28 = vector.load %arg10[%c1_27, %c0_28] : memref<32x384xf32, #tpu.memory_space<vmem>>, vector<15x128xf32>
    tpu.vector_store %arg10[%c1_27, %c0_28], %27 {strides = array<i32>} : memref<32x384xf32, #tpu.memory_space<vmem>>, vector<15x128xf32>,
    %29 = vector.extract_strided_slice %23 {offsets = [1, 0], sizes = [15, 128], strides = [1, 1]} : vector<32x128xf32> to vector<15x128xf32>
    %c0_29 = arith.constant 0 : index
    %c256 = arith.constant 256 : index
    %30 = vector.load %arg10[%c0_29, %c256] : memref<32x384xf32, #tpu.memory_space<vmem>>, vector<15x128xf32>
    tpu.vector_store %arg10[%c0_29, %c256], %29 {strides = array<i32>} : memref<32x384xf32, #tpu.memory_space<vmem>>, vector<15x128xf32>,
    %c15_30 = arith.constant 15 : index
    %c256_31 = arith.constant 256 : index
    %31 = vector.load %arg10[%c15_30, %c256_31] : memref<32x384xf32, #tpu.memory_space<vmem>>, vector<1x128xf32>
    tpu.vector_store %arg10[%c15_30, %c256_31], %24 {strides = array<i32>} : memref<32x384xf32, #tpu.memory_space<vmem>>, vector<1x128xf32>,
    %c16_32 = arith.constant 16 : index
    %c0_33 = arith.constant 0 : index
    %32 = vector.load %arg10[%c16_32, %c0_33] : memref<32x384xf32, #tpu.memory_space<vmem>>, vector<1x128xf32>
    tpu.vector_store %arg10[%c16_32, %c0_33], %24 {strides = array<i32>} : memref<32x384xf32, #tpu.memory_space<vmem>>, vector<1x128xf32>,
    %33 = vector.extract_strided_slice %23 {offsets = [16, 0], sizes = [15, 128], strides = [1, 1]} : vector<32x128xf32> to vector<15x128xf32>
    %c17_34 = arith.constant 17 : index
    %c0_35 = arith.constant 0 : index
    %34 = vector.load %arg10[%c17_34, %c0_35] : memref<32x384xf32, #tpu.memory_space<vmem>>, vector<15x128xf32>
    tpu.vector_store %arg10[%c17_34, %c0_35], %33 {strides = array<i32>} : memref<32x384xf32, #tpu.memory_space<vmem>>, vector<15x128xf32>,
    %35 = vector.extract_strided_slice %23 {offsets = [17, 0], sizes = [15, 128], strides = [1, 1]} : vector<32x128xf32> to vector<15x128xf32>
    %c16_36 = arith.constant 16 : index
    %c256_37 = arith.constant 256 : index
    %36 = vector.load %arg10[%c16_36, %c256_37] : memref<32x384xf32, #tpu.memory_space<vmem>>, vector<15x128xf32>
    tpu.vector_store %arg10[%c16_36, %c256_37], %35 {strides = array<i32>} : memref<32x384xf32, #tpu.memory_space<vmem>>, vector<15x128xf32>,
    %c31_38 = arith.constant 31 : index
    %c256_39 = arith.constant 256 : index
    %37 = vector.load %arg10[%c31_38, %c256_39] : memref<32x384xf32, #tpu.memory_space<vmem>>, vector<1x128xf32>
    tpu.vector_store %arg10[%c31_38, %c256_39], %24 {strides = array<i32>} : memref<32x384xf32, #tpu.memory_space<vmem>>, vector<1x128xf32>,
    %c0_40 = arith.constant 0 : index
    %c0_41 = arith.constant 0 : index
    %38 = vector.load %arg10[%c0_40, %c0_41] : memref<32x384xf32, #tpu.memory_space<vmem>>, vector<32x384xf32>
    %c0_42 = arith.constant 0 : index
    %c0_43 = arith.constant 0 : index
    %39 = vector.load %arg4[%c0_42, %c0_43] : memref<384x128xf32, #tpu.memory_space<vmem>>, vector<384x128xf32>
    %cst_44 = arith.constant dense<0.000000e+00> : vector<32x128xf32>
    %40 = tpu.matmul %38, %39, %cst_44 {dimension_numbers = #tpu.dot_dimension_numbers<[1], [0], [0], [1], [0, 0, 1, 1], [], []>} : vector<32x384xf32>, vector<384x128xf32>, vector<32x128xf32> -> vector<32x128xf32>
    %c0_45 = arith.constant 0 : index
    %c0_46 = arith.constant 0 : index
    %41 = vector.load %arg5[%c0_45, %c0_46] : memref<1x128xf32, #tpu.memory_space<vmem>>, vector<1x128xf32>
    %42 = vector.broadcast %41 : vector<1x128xf32> to vector<32x128xf32>
    %43 = arith.addf %40, %42 : vector<32x128xf32>
    %c0_47 = arith.constant 0 : index
    %c0_48 = arith.constant 0 : index
    %44 = vector.load %arg7[%c0_47, %c0_48] : memref<32x128xf32, #tpu.memory_space<vmem>>, vector<32x128xf32>
    tpu.vector_store %arg7[%c0_47, %c0_48], %43 {strides = array<i32>} : memref<32x128xf32, #tpu.memory_space<vmem>>, vector<32x128xf32>,
    %cst_49 = arith.constant 0.000000e+00 : f32
    %45 = vector.broadcast %cst_49 : f32 to vector<32x128xf32>
    %46 = arith.maximumf %43, %45 : vector<32x128xf32>
    %c0_50 = arith.constant 0 : index
    %c0_51 = arith.constant 0 : index
    %47 = vector.load %arg8[%c0_50, %c0_51] : memref<32x128xf32, #tpu.memory_space<vmem>>, vector<32x128xf32>
    tpu.vector_store %arg8[%c0_50, %c0_51], %46 {strides = array<i32>} : memref<32x128xf32, #tpu.memory_space<vmem>>, vector<32x128xf32>,
    return
  }
  func.func @transform_0(%arg0: i32) -> (i32, i32) {
    %c0_i32 = arith.constant 0 : i32
    %c0_i32_0 = arith.constant 0 : i32
    %c0_i32_1 = arith.constant 0 : i32
    return %c0_i32, %c0_i32_0 : i32, i32
  }
  func.func @transform_1(%arg0: i32) -> (i32, i32) {
    %c0_i32 = arith.constant 0 : i32
    %c0_i32_0 = arith.constant 0 : i32
    %c0_i32_1 = arith.constant 0 : i32
    return %c0_i32, %c0_i32_0 : i32, i32
  }
  func.func @transform_2(%arg0: i32) -> (i32, i32) {
    %c0_i32 = arith.constant 0 : i32
    %c0_i32_0 = arith.constant 0 : i32
    %c0_i32_1 = arith.constant 0 : i32
    return %c0_i32, %c0_i32_0 : i32, i32
  }
  func.func @transform_3(%arg0: i32) -> (i32, i32) {
    %c0_i32 = arith.constant 0 : i32
    %c0_i32_0 = arith.constant 0 : i32
    %c0_i32_1 = arith.constant 0 : i32
    return %c0_i32, %c0_i32_0 : i32, i32
  }
  func.func @transform_4(%arg0: i32) -> (i32, i32) {
    %c0_i32 = arith.constant 0 : i32
    %c0_i32_0 = arith.constant 0 : i32
    %c0_i32_1 = arith.constant 0 : i32
    return %c0_i32, %c0_i32_0 : i32, i32
  }
  func.func @transform_5(%arg0: i32) -> (i32, i32) {
    %c0_i32 = arith.constant 0 : i32
    %c0_i32_0 = arith.constant 0 : i32
    %c0_i32_1 = arith.constant 0 : i32
    return %c0_i32, %c0_i32_0 : i32, i32
  }
  func.func @transform_6(%arg0: i32) -> (i32, i32) {
    %c0_i32 = arith.constant 0 : i32
    %c0_i32_0 = arith.constant 0 : i32
    %c0_i32_1 = arith.constant 0 : i32
    return %c0_i32, %c0_i32_0 : i32, i32
  }
  func.func @transform_7(%arg0: i32) -> (i32, i32) {
    %c0_i32 = arith.constant 0 : i32
    %c0_i32_0 = arith.constant 0 : i32
    %c0_i32_1 = arith.constant 0 : i32
    return %c0_i32, %c0_i32_0 : i32, i32
  }
}

</mosaic_0001>

<llo_original>
// kernel: _selective_forward.1
$region0: #{_selective_forward.1}
  #allocation0 [shape = 'u32[]', space=smem, size = 0x4, offset = 0x4, fixed_abs, tag = 'smem constant byte address 0x4 - core index']
  #allocation1 [shape = 'u32[72,128]{1,0:T(1,128)}', space=vmem, size = 0x9000, scoped, tag = 'internal scratch']
  #allocation2 [shape = 'f32[32,192]{1,0:T(8,128)}', space=vmem, size = 0x8000, scoped, tag = 'scratch operand']
  #allocation3 [shape = 'f32[32,384]{1,0:T(8,128)}', space=vmem, size = 0xc000, scoped, tag = 'scratch operand']
  %s0 = inlined_call_operand.vmem [shape: f32[32,64], index: 0, kind: input, shape index: {}]
  %s1 = inlined_call_operand.hbm [shape: f32[192,128], index: 1, kind: input, shape index: {}]
  %s2 = inlined_call_operand.vmem [shape: f32[1,128], index: 2, kind: input, shape index: {}]
  %s3 = inlined_call_operand.vmem [shape: f32[384,128], index: 3, kind: input, shape index: {}]
  %s4 = inlined_call_operand.vmem [shape: f32[1,128], index: 4, kind: input, shape index: {}]
  %s5 = inlined_call_operand.vmem [shape: f32[32,128], index: 5, kind: output, shape index: {0}]
  %s6 = inlined_call_operand.vmem [shape: f32[32,128], index: 6, kind: output, shape index: {1}]
  %s7 = inlined_call_operand.vmem [shape: f32[32,128], index: 7, kind: output, shape index: {2}]
  %8 = xla_tuple %s5, %s6, %s7
  %s9 = sld [smem:[#allocation0]]
  $region50: #{_selective_forward.1} parent=0
    _
  %s11 = ssub.s32 1, %s9
  %s12 = scalar_select 0, %s11, %s9
  $region1: #{_selective_forward.1} parent=0
    #allocation4 [shape = 'u8[98304]{0}', space=vmem, size = 0x18000, scoped, tag = 'input window, operand 1, single buffered']
    #allocation5 [shape = 's32[1]{0}', space=sflag, size = 0x4, scoped, tag = 'scoped memory for _selective_forward.1']
    %13 = vsyncpa [#allocation5], 0
    // Predicated region
    $region2: #{_selective_forward.1} parent=1 // pred_check
      _
    $region3: #{_selective_forward.1} parent=1 // pred_check_branch
      %15 = sbr.rel (0) target = $region5
    $region4: #{_selective_forward.1} parent=1 // pred_region
      _
    $region5: #{_selective_forward.1} parent=1 // pred_fallthru
      _
    // Predicated region
    $region6: #{_selective_forward.1} parent=1 // pred_check
      _
    $region7: #{_selective_forward.1} parent=1 // pred_check_branch
      %17 = sbr.rel (0) target = $region9
    $region8: #{_selective_forward.1} parent=1 // pred_region
      %19 = vsyncadd [#allocation5], 0
      %s20 = sshll.u32 %s1, 4
      %s21 = int_to_ptr.hbm [resolvable:$true] %s20
      %s22 = sshll.u32 [#allocation4], 4
      %s23 = int_to_ptr.vmem [resolvable:$true] %s22
      %28 = dma.hbm_to_vmem [thread:$0]  %s21, 3072, %s23, [#allocation5], 128, 128, 8
    $region9: #{_selective_forward.1} parent=1 // pred_fallthru
      _
    // Predicated region
    $region10: #{_selective_forward.1} parent=1 // pred_check
      _
    $region11: #{_selective_forward.1} parent=1 // pred_check_branch
      %30 = sbr.rel (0) target = $region13
    $region12: #{_selective_forward.1} parent=1 // pred_region
      _
    $region13: #{_selective_forward.1} parent=1 // pred_fallthru
      _
    // Predicated region
    $region14: #{_selective_forward.1} parent=1 // pred_check
      _
    $region15: #{_selective_forward.1} parent=1 // pred_check_branch
      %32 = sbr.rel (0) target = $region17
    $region16: #{_selective_forward.1} parent=1 // pred_region
      _
    $region17: #{_selective_forward.1} parent=1 // pred_fallthru
      _
    // Predicated region
    $region18: #{_selective_forward.1} parent=1 // pred_check
      _
    $region19: #{_selective_forward.1} parent=1 // pred_check_branch
      %34 = sbr.rel (0) target = $region21
    $region20: #{_selective_forward.1} parent=1 // pred_region
      _
    $region21: #{_selective_forward.1} parent=1 // pred_fallthru
      _
    // Predicated region
    $region22: #{_selective_forward.1} parent=1 // pred_check
      _
    $region23: #{_selective_forward.1} parent=1 // pred_check_branch
      %36 = sbr.rel (0) target = $region25
    $region24: #{_selective_forward.1} parent=1 // pred_region
      %38 = dma.done [#allocation5], 3072
    $region25: #{_selective_forward.1} parent=1 // pred_fallthru
      _
    %v39 = vld [vmem:[%s0] sm:$0xff]
    %v40 = vld [vmem:[%s0 + $0x8] sm:$0xff]
    %v41 = vld [vmem:[%s0 + $0x10] sm:$0xff]
    %v42 = vld [vmem:[%s0 + $0x18] sm:$0xff]
    %47 = vrot.lane.b32.xlu0 %v39, 64
    %v48 = vpop.permute.xlu0 %47
    %49 = vrot.lane.b32.xlu0 %v40, 64
    %v50 = vpop.permute.xlu0 %49
    %51 = vrot.lane.b32.xlu0 %v41, 64
    %v52 = vpop.permute.xlu0 %51
    %53 = vrot.lane.b32.xlu0 %v42, 64
    %v54 = vpop.permute.xlu0 %53
    %vm59 = vcmask 1048064
    %60 = vst.msk [vmem:[#allocation2] sm:$0xff] %vm59, %v48
    %61 = vst.msk [vmem:[#allocation2 + $0x10] sm:$0xff] %vm59, %v50
    %62 = vst.msk [vmem:[#allocation2 + $0x20] sm:$0xff] %vm59, %v52
    %63 = vst.msk [vmem:[#allocation2 + $0x30] sm:$0xff] %vm59, %v54
    %vm64 = vcmask 516096
    %65 = vst.msk [vmem:[#allocation2] sm:$0x1] %vm64, 0.0
    %vm66 = vcmask 1040384
    %v67 = vrot.slane %v39, 7
    %v68 = vrot.slane %v40, 7
    %v69 = vsel %vm66, %v67, %v68
    %vm72 = vcmask 523265
    %73 = vst.msk [vmem:[#allocation2] sm:$0xfe] %vm72, %v67
    %vm74 = vcmask 523264
    %75 = vst.msk [vmem:[#allocation2 + $0x10] sm:$0xff] %vm74, %v69
    %vm76 = vcmask 1046528
    %v77 = vrot.slane %v39, 1
    %v78 = vrot.slane %v40, 1
    %v79 = vsel %vm76, %v77, %v78
    %82 = vst.msk [vmem:[#allocation2 + $0x8] sm:$0xff] %vm74, %v79
    %vm83 = vcmask 522240
    %84 = vst.msk [vmem:[#allocation2 + $0x18] sm:$0x7f] %vm83, %v78
    %85 = vst.msk [vmem:[#allocation2 + $0x1f] sm:$0x1] %vm64, 0.0
    %86 = vst.msk [vmem:[#allocation2 + $0x20] sm:$0x1] %vm64, 0.0
    %v87 = vrot.slane %v41, 7
    %v88 = vrot.slane %v42, 7
    %v89 = vsel %vm66, %v87, %v88
    %92 = vst.msk [vmem:[#allocation2 + $0x20] sm:$0xfe] %vm72, %v87
    %93 = vst.msk [vmem:[#allocation2 + $0x30] sm:$0xff] %vm74, %v89
    %v94 = vrot.slane %v41, 1
    %v95 = vrot.slane %v42, 1
    %v96 = vsel %vm76, %v94, %v95
    %99 = vst.msk [vmem:[#allocation2 + $0x28] sm:$0xff] %vm74, %v96
    %100 = vst.msk [vmem:[#allocation2 + $0x38] sm:$0x7f] %vm83, %v95
    %101 = vst.msk [vmem:[#allocation2 + $0x3f] sm:$0x1] %vm64, 0.0
    %v102 = vld [vmem:[#allocation2] sm:$0xff]
    %v103 = vld [vmem:[#allocation2 + $0x8] sm:$0xff]
    %v104 = vld [vmem:[#allocation2 + $0x10] sm:$0xff]
    %v105 = vld [vmem:[#allocation2 + $0x18] sm:$0xff]
    %v106 = vld [vmem:[#allocation2 + $0x20] sm:$0xff]
    %v107 = vld [vmem:[#allocation2 + $0x28] sm:$0xff]
    %v108 = vld [vmem:[#allocation2 + $0x30] sm:$0xff]
    %v109 = vld [vmem:[#allocation2 + $0x38] sm:$0xff]
    %v110 = vld [vmem:[#allocation4] sm:$0xff]
    %v111 = vld [vmem:[#allocation4 + $0x8] sm:$0xff]
    %v112 = vld [vmem:[#allocation4 + $0x10] sm:$0xff]
    %v113 = vld [vmem:[#allocation4 + $0x18] sm:$0xff]
    %v114 = vld [vmem:[#allocation4 + $0x20] sm:$0xff]
    %v115 = vld [vmem:[#allocation4 + $0x28] sm:$0xff]
    %v116 = vld [vmem:[#allocation4 + $0x30] sm:$0xff]
    %v117 = vld [vmem:[#allocation4 + $0x38] sm:$0xff]
    %v118 = vld [vmem:[#allocation4 + $0x40] sm:$0xff]
    %v119 = vld [vmem:[#allocation4 + $0x48] sm:$0xff]
    %v120 = vld [vmem:[#allocation4 + $0x50] sm:$0xff]
    %v121 = vld [vmem:[#allocation4 + $0x58] sm:$0xff]
    %v122 = vld [vmem:[#allocation4 + $0x60] sm:$0xff]
    %v123 = vld [vmem:[#allocation4 + $0x68] sm:$0xff]
    %v124 = vld [vmem:[#allocation4 + $0x70] sm:$0xff]
    %v125 = vld [vmem:[#allocation4 + $0x78] sm:$0xff]
    %v126 = vld [vmem:[#allocation4 + $0x80] sm:$0xff]
    %v127 = vld [vmem:[#allocation4 + $0x88] sm:$0xff]
    %v128 = vld [vmem:[#allocation4 + $0x90] sm:$0xff]
    %v129 = vld [vmem:[#allocation4 + $0x98] sm:$0xff]
    %v130 = vld [vmem:[#allocation4 + $0xa0] sm:$0xff]
    %v131 = vld [vmem:[#allocation4 + $0xa8] sm:$0xff]
    %v132 = vld [vmem:[#allocation4 + $0xb0] sm:$0xff]
    %v133 = vld [vmem:[#allocation4 + $0xb8] sm:$0xff]
    %v134 = vld [vmem:[%s2] sm:$0x1]
    %v136 = vperm.slane %v134, 0
    %v139 = vsel %vm74, %v103, 0
    %v142 = vsel %vm74, %v105, 0
    %v145 = vsel %vm74, %v107, 0
    %v148 = vsel %vm74, %v109, 0
    %150 = vmatpush.msra.mxu0 %v125
    %151 = vmatpush.msra.mxu0 %v124
    %152 = vmatpush.msra.mxu0 %v123
    %153 = vmatpush.msra.mxu0 %v122
    %154 = vmatpush.msra.mxu0 %v121
    %155 = vmatpush.msra.mxu0 %v120
    %156 = vmatpush.msra.mxu0 %v119
    %157 = vmatpush.msra.mxu0 %v118
    %158 = vmatpush.msra.mxu0 %v117
    %159 = vmatpush.msra.mxu0 %v116
    %160 = vmatpush.msra.mxu0 %v115
    %161 = vmatpush.msra.mxu0 %v114
    %162 = vmatpush.msra.mxu0 %v113
    %163 = vmatpush.msra.mxu0 %v112
    %164 = vmatpush.msra.mxu0 %v111
    %165 = vmatpush.msra.mxu0 %v110
    %166 = vmatmul.f32.gmra.mxu0 %v102
    %v167 = vpop.f32.mrf.mxu0
    %v168 = vadd.f32 %v136, %v167
    %169 = vmatmul.f32.gmra.mxu0 %v104
    %v170 = vpop.f32.mrf.mxu0
    %v171 = vadd.f32 %v136, %v170
    %172 = vmatmul.f32.gmra.mxu0 %v106
    %v173 = vpop.f32.mrf.mxu0
    %v174 = vadd.f32 %v136, %v173
    %175 = vmatmul.f32.gmra.mxu0 %v108
    %v176 = vpop.f32.mrf.mxu0
    %v177 = vadd.f32 %v136, %v176
    %178 = vdwg.mxu0
    %179 = vmatpush.msra.mxu0 0.0
    %180 = vmatpush.msra.mxu0 0.0
    %181 = vmatpush.msra.mxu0 0.0
    %182 = vmatpush.msra.mxu0 0.0
    %183 = vmatpush.msra.mxu0 0.0
    %184 = vmatpush.msra.mxu0 0.0
    %185 = vmatpush.msra.mxu0 0.0
    %186 = vmatpush.msra.mxu0 0.0
    %187 = vmatpush.msra.mxu0 %v133
    %188 = vmatpush.msra.mxu0 %v132
    %189 = vmatpush.msra.mxu0 %v131
    %190 = vmatpush.msra.mxu0 %v130
    %191 = vmatpush.msra.mxu0 %v129
    %192 = vmatpush.msra.mxu0 %v128
    %193 = vmatpush.msra.mxu0 %v127
    %194 = vmatpush.msra.mxu0 %v126
    %195 = vmatmul.f32.gmra.mxu0 %v139
    %v196 = vpop.f32.mrf.mxu0
    %v197 = vadd.f32 %v168, %v196
    %198 = vmatmul.f32.gmra.mxu0 %v142
    %v199 = vpop.f32.mrf.mxu0
    %v200 = vadd.f32 %v171, %v199
    %201 = vmatmul.f32.gmra.mxu0 %v145
    %v202 = vpop.f32.mrf.mxu0
    %v203 = vadd.f32 %v174, %v202
    %204 = vmatmul.f32.gmra.mxu0 %v148
    %v205 = vpop.f32.mrf.mxu0
    %v206 = vadd.f32 %v177, %v205
    %207 = vdwg.mxu0
    %208 = vst [vmem:[%s5] sm:$0xff] %v197
    %209 = vst [vmem:[%s5 + $0x8] sm:$0xff] %v200
    %210 = vst [vmem:[%s5 + $0x10] sm:$0xff] %v203
    %211 = vst [vmem:[%s5 + $0x18] sm:$0xff] %v206
    %v212 = vmax.f32 %v197, 0.0
    %v213 = vmax.f32 %v200, 0.0
    %v214 = vmax.f32 %v203, 0.0
    %v215 = vmax.f32 %v206, 0.0
    %216 = vst [vmem:[#allocation3 + $0x8] sm:$0xff] %v212
    %217 = vst [vmem:[#allocation3 + $0x20] sm:$0xff] %v213
    %218 = vst [vmem:[#allocation3 + $0x38] sm:$0xff] %v214
    %219 = vst [vmem:[#allocation3 + $0x50] sm:$0xff] %v215
    %220 = vst [vmem:[#allocation3] sm:$0x1] 0.0
    %v223 = vrot.slane %v212, 7
    %v224 = vrot.slane %v213, 7
    %v225 = vsel %vm66, %v223, %v224
    %228 = vst [vmem:[#allocation3] sm:$0xfe] %v223
    %229 = vst [vmem:[#allocation3 + $0x18] sm:$0xff] %v225
    %v230 = vrot.slane %v212, 1
    %v231 = vrot.slane %v213, 1
    %v232 = vsel %vm76, %v230, %v231
    %235 = vst [vmem:[#allocation3 + $0x10] sm:$0xff] %v232
    %236 = vst [vmem:[#allocation3 + $0x28] sm:$0x7f] %v231
    %237 = vst [vmem:[#allocation3 + $0x2f] sm:$0x1] 0.0
    %238 = vst [vmem:[#allocation3 + $0x30] sm:$0x1] 0.0
    %v241 = vrot.slane %v214, 7
    %v242 = vrot.slane %v215, 7
    %v243 = vsel %vm66, %v241, %v242
    %246 = vst [vmem:[#allocation3 + $0x30] sm:$0xfe] %v241
    %247 = vst [vmem:[#allocation3 + $0x48] sm:$0xff] %v243
    %v248 = vrot.slane %v214, 1
    %v249 = vrot.slane %v215, 1
    %v250 = vsel %vm76, %v248, %v249
    %253 = vst [vmem:[#allocation3 + $0x40] sm:$0xff] %v250
    %254 = vst [vmem:[#allocation3 + $0x58] sm:$0x7f] %v249
    %255 = vst [vmem:[#allocation3 + $0x5f] sm:$0x1] 0.0
    %v256 = vld [vmem:[#allocation3] sm:$0xff]
    %v257 = vld [vmem:[#allocation3 + $0x8] sm:$0xff]
    %v258 = vld [vmem:[#allocation3 + $0x10] sm:$0xff]
    %v259 = vld [vmem:[#allocation3 + $0x18] sm:$0xff]
    %v260 = vld [vmem:[#allocation3 + $0x20] sm:$0xff]
    %v261 = vld [vmem:[#allocation3 + $0x28] sm:$0xff]
    %v262 = vld [vmem:[#allocation3 + $0x30] sm:$0xff]
    %v263 = vld [vmem:[#allocation3 + $0x38] sm:$0xff]
    %v264 = vld [vmem:[#allocation3 + $0x40] sm:$0xff]
    %v265 = vld [vmem:[#allocation3 + $0x48] sm:$0xff]
    %v266 = vld [vmem:[#allocation3 + $0x50] sm:$0xff]
    %v267 = vld [vmem:[#allocation3 + $0x58] sm:$0xff]
    %v268 = vld [vmem:[%s3] sm:$0xff]
    %v269 = vld [vmem:[%s3 + $0x8] sm:$0xff]
    %v270 = vld [vmem:[%s3 + $0x10] sm:$0xff]
    %v271 = vld [vmem:[%s3 + $0x18] sm:$0xff]
    %v272 = vld [vmem:[%s3 + $0x20] sm:$0xff]
    %v273 = vld [vmem:[%s3 + $0x28] sm:$0xff]
    %v274 = vld [vmem:[%s3 + $0x30] sm:$0xff]
    %v275 = vld [vmem:[%s3 + $0x38] sm:$0xff]
    %v276 = vld [vmem:[%s3 + $0x40] sm:$0xff]
    %v277 = vld [vmem:[%s3 + $0x48] sm:$0xff]
    %v278 = vld [vmem:[%s3 + $0x50] sm:$0xff]
    %v279 = vld [vmem:[%s3 + $0x58] sm:$0xff]
    %v280 = vld [vmem:[%s3 + $0x60] sm:$0xff]
    %v281 = vld [vmem:[%s3 + $0x68] sm:$0xff]
    %v282 = vld [vmem:[%s3 + $0x70] sm:$0xff]
    %v283 = vld [vmem:[%s3 + $0x78] sm:$0xff]
    %v284 = vld [vmem:[%s3 + $0x80] sm:$0xff]
    %v285 = vld [vmem:[%s3 + $0x88] sm:$0xff]
    %v286 = vld [vmem:[%s3 + $0x90] sm:$0xff]
    %v287 = vld [vmem:[%s3 + $0x98] sm:$0xff]
    %v288 = vld [vmem:[%s3 + $0xa0] sm:$0xff]
    %v289 = vld [vmem:[%s3 + $0xa8] sm:$0xff]
    %v290 = vld [vmem:[%s3 + $0xb0] sm:$0xff]
    %v291 = vld [vmem:[%s3 + $0xb8] sm:$0xff]
    %v292 = vld [vmem:[%s3 + $0xc0] sm:$0xff]
    %v293 = vld [vmem:[%s3 + $0xc8] sm:$0xff]
    %v294 = vld [vmem:[%s3 + $0xd0] sm:$0xff]
    %v295 = vld [vmem:[%s3 + $0xd8] sm:$0xff]
    %v296 = vld [vmem:[%s3 + $0xe0] sm:$0xff]
    %v297 = vld [vmem:[%s3 + $0xe8] sm:$0xff]
    %v298 = vld [vmem:[%s3 + $0xf0] sm:$0xff]
    %v299 = vld [vmem:[%s3 + $0xf8] sm:$0xff]
    %v300 = vld [vmem:[%s3 + $0x100] sm:$0xff]
    %v301 = vld [vmem:[%s3 + $0x108] sm:$0xff]
    %v302 = vld [vmem:[%s3 + $0x110] sm:$0xff]
    %v303 = vld [vmem:[%s3 + $0x118] sm:$0xff]
    %v304 = vld [vmem:[%s3 + $0x120] sm:$0xff]
    %v305 = vld [vmem:[%s3 + $0x128] sm:$0xff]
    %v306 = vld [vmem:[%s3 + $0x130] sm:$0xff]
    %v307 = vld [vmem:[%s3 + $0x138] sm:$0xff]
    %v308 = vld [vmem:[%s3 + $0x140] sm:$0xff]
    %v309 = vld [vmem:[%s3 + $0x148] sm:$0xff]
    %v310 = vld [vmem:[%s3 + $0x150] sm:$0xff]
    %v311 = vld [vmem:[%s3 + $0x158] sm:$0xff]
    %v312 = vld [vmem:[%s3 + $0x160] sm:$0xff]
    %v313 = vld [vmem:[%s3 + $0x168] sm:$0xff]
    %v314 = vld [vmem:[%s3 + $0x170] sm:$0xff]
    %v315 = vld [vmem:[%s3 + $0x178] sm:$0xff]
    %v316 = vld [vmem:[%s4] sm:$0x1]
    %v318 = vperm.slane %v316, 0
    %320 = vmatpush.msra.mxu0 %v283
    %321 = vmatpush.msra.mxu0 %v282
    %322 = vmatpush.msra.mxu0 %v281
    %323 = vmatpush.msra.mxu0 %v280
    %324 = vmatpush.msra.mxu0 %v279
    %325 = vmatpush.msra.mxu0 %v278
    %326 = vmatpush.msra.mxu0 %v277
    %327 = vmatpush.msra.mxu0 %v276
    %328 = vmatpush.msra.mxu0 %v275
    %329 = vmatpush.msra.mxu0 %v274
    %330 = vmatpush.msra.mxu0 %v273
    %331 = vmatpush.msra.mxu0 %v272
    %332 = vmatpush.msra.mxu0 %v271
    %333 = vmatpush.msra.mxu0 %v270
    %334 = vmatpush.msra.mxu0 %v269
    %335 = vmatpush.msra.mxu0 %v268
    %336 = vmatmul.f32.gmra.mxu0 %v256
    %v337 = vpop.f32.mrf.mxu0
    %v338 = vadd.f32 %v318, %v337
    %339 = vmatmul.f32.gmra.mxu0 %v259
    %v340 = vpop.f32.mrf.mxu0
    %v341 = vadd.f32 %v318, %v340
    %342 = vmatmul.f32.gmra.mxu0 %v262
    %v343 = vpop.f32.mrf.mxu0
    %v344 = vadd.f32 %v318, %v343
    %345 = vmatmul.f32.gmra.mxu0 %v265
    %v346 = vpop.f32.mrf.mxu0
    %v347 = vadd.f32 %v318, %v346
    %348 = vdwg.mxu0
    %349 = vmatpush.msra.mxu0 %v299
    %350 = vmatpush.msra.mxu0 %v298
    %351 = vmatpush.msra.mxu0 %v297
    %352 = vmatpush.msra.mxu0 %v296
    %353 = vmatpush.msra.mxu0 %v295
    %354 = vmatpush.msra.mxu0 %v294
    %355 = vmatpush.msra.mxu0 %v293
    %356 = vmatpush.msra.mxu0 %v292
    %357 = vmatpush.msra.mxu0 %v291
    %358 = vmatpush.msra.mxu0 %v290
    %359 = vmatpush.msra.mxu0 %v289
    %360 = vmatpush.msra.mxu0 %v288
    %361 = vmatpush.msra.mxu0 %v287
    %362 = vmatpush.msra.mxu0 %v286
    %363 = vmatpush.msra.mxu0 %v285
    %364 = vmatpush.msra.mxu0 %v284
    %365 = vmatmul.f32.gmra.mxu0 %v257
    %v366 = vpop.f32.mrf.mxu0
    %v367 = vadd.f32 %v338, %v366
    %368 = vmatmul.f32.gmra.mxu0 %v260
    %v369 = vpop.f32.mrf.mxu0
    %v370 = vadd.f32 %v341, %v369
    %371 = vmatmul.f32.gmra.mxu0 %v263
    %v372 = vpop.f32.mrf.mxu0
    %v373 = vadd.f32 %v344, %v372
    %374 = vmatmul.f32.gmra.mxu0 %v266
    %v375 = vpop.f32.mrf.mxu0
    %v376 = vadd.f32 %v347, %v375
    %377 = vdwg.mxu0
    %378 = vmatpush.msra.mxu0 %v315
    %379 = vmatpush.msra.mxu0 %v314
    %380 = vmatpush.msra.mxu0 %v313
    %381 = vmatpush.msra.mxu0 %v312
    %382 = vmatpush.msra.mxu0 %v311
    %383 = vmatpush.msra.mxu0 %v310
    %384 = vmatpush.msra.mxu0 %v309
    %385 = vmatpush.msra.mxu0 %v308
    %386 = vmatpush.msra.mxu0 %v307
    %387 = vmatpush.msra.mxu0 %v306
    %388 = vmatpush.msra.mxu0 %v305
    %389 = vmatpush.msra.mxu0 %v304
    %390 = vmatpush.msra.mxu0 %v303
    %391 = vmatpush.msra.mxu0 %v302
    %392 = vmatpush.msra.mxu0 %v301
    %393 = vmatpush.msra.mxu0 %v300
    %394 = vmatmul.f32.gmra.mxu0 %v258
    %v395 = vpop.f32.mrf.mxu0
    %v396 = vadd.f32 %v367, %v395
    %397 = vmatmul.f32.gmra.mxu0 %v261
    %v398 = vpop.f32.mrf.mxu0
    %v399 = vadd.f32 %v370, %v398
    %400 = vmatmul.f32.gmra.mxu0 %v264
    %v401 = vpop.f32.mrf.mxu0
    %v402 = vadd.f32 %v373, %v401
    %403 = vmatmul.f32.gmra.mxu0 %v267
    %v404 = vpop.f32.mrf.mxu0
    %v405 = vadd.f32 %v376, %v404
    %406 = vdwg.mxu0
    %407 = vst [vmem:[%s6] sm:$0xff] %v396
    %408 = vst [vmem:[%s6 + $0x8] sm:$0xff] %v399
    %409 = vst [vmem:[%s6 + $0x10] sm:$0xff] %v402
    %410 = vst [vmem:[%s6 + $0x18] sm:$0xff] %v405
    %v411 = vmax.f32 %v396, 0.0
    %v412 = vmax.f32 %v399, 0.0
    %v413 = vmax.f32 %v402, 0.0
    %v414 = vmax.f32 %v405, 0.0
    %415 = vst [vmem:[%s7] sm:$0xff] %v411
    %416 = vst [vmem:[%s7 + $0x8] sm:$0xff] %v412
    %417 = vst [vmem:[%s7 + $0x10] sm:$0xff] %v413
    %418 = vst [vmem:[%s7 + $0x18] sm:$0xff] %v414
    // Predicated region
    $region26: #{_selective_forward.1} parent=1 // pred_check
      _
    $region27: #{_selective_forward.1} parent=1 // pred_check_branch
      %420 = sbr.rel (0) target = $region29
    $region28: #{_selective_forward.1} parent=1 // pred_region
      _
    $region29: #{_selective_forward.1} parent=1 // pred_fallthru
      _
    // Predicated region
    $region30: #{_selective_forward.1} parent=1 // pred_check
      _
    $region31: #{_selective_forward.1} parent=1 // pred_check_branch
      %422 = sbr.rel (0) target = $region33
    $region32: #{_selective_forward.1} parent=1 // pred_region
      _
    $region33: #{_selective_forward.1} parent=1 // pred_fallthru
      _
    // Predicated region
    $region34: #{_selective_forward.1} parent=1 // pred_check
      _
    $region35: #{_selective_forward.1} parent=1 // pred_check_branch
      %424 = sbr.rel (0) target = $region37
    $region36: #{_selective_forward.1} parent=1 // pred_region
      _
    $region37: #{_selective_forward.1} parent=1 // pred_fallthru
      _
    // Predicated region
    $region38: #{_selective_forward.1} parent=1 // pred_check
      _
    $region39: #{_selective_forward.1} parent=1 // pred_check_branch
      %426 = sbr.rel (0) target = $region41
    $region40: #{_selective_forward.1} parent=1 // pred_region
      _
    $region41: #{_selective_forward.1} parent=1 // pred_fallthru
      _
    // Predicated region
    $region42: #{_selective_forward.1} parent=1 // pred_check
      _
    $region43: #{_selective_forward.1} parent=1 // pred_check_branch
      %428 = sbr.rel (0) target = $region45
    $region44: #{_selective_forward.1} parent=1 // pred_region
      _
    $region45: #{_selective_forward.1} parent=1 // pred_fallthru
      _
    // Predicated region
    $region46: #{_selective_forward.1} parent=1 // pred_check
      _
    $region47: #{_selective_forward.1} parent=1 // pred_check_branch
      %430 = sbr.rel (0) target = $region49
    $region48: #{_selective_forward.1} parent=1 // pred_region
      _
    $region49: #{_selective_forward.1} parent=1 // pred_fallthru
      _
    %431 = vsyncpa [#allocation5], 1

</llo_original>
